<compile_context>
chip_gen: v7x
topology: tpu7x:2x2x1
jax: 0.10.0
libtpu: 0.0.40
codegen_flags: <defaults>
</compile_context>

<pallas_src>
import functools

import jax
import jax.numpy as jnp
from jax.experimental import pallas as pl
from jax.experimental.pallas import tpu as pltpu


# ------------------------------ tile selection ------------------------------ #

def _round_up(x, m):
    return ((x + m - 1) // m) * m


def _pick_row_tile(n, target=512):
    """Dest-row tile: as large as possible (less redundant h_j HBM traffic),
    but keep >= 2 row tiles so the 'parallel' axis still splits across both
    TensorCores on v7x, and keep padded-row waste bounded."""
    n128 = _round_up(n, 128)
    best, t = 128, 128
    while t <= min(target, n128):
        r = _round_up(n, t)
        waste_ok = (r - n128) <= max(128, n128 // 8)
        two_tiles_ok = (r // t >= 2) or (n128 // 128 < 2)
        if waste_ok and two_tiles_ok:
            best = t
        t *= 2
    return best


def _pick_col_tile(n, target=2048):
    """Source-node tile: big enough that each grid step moves O(0.5 MiB) of
    adj/h (per-step overhead ~0.35us / ~600 cyc), with bounded padded-column
    waste so O(N^2) work does not inflate."""
    n128 = _round_up(n, 128)
    best, t = 128, 128
    while t <= min(target, n128):
        waste_ok = (_round_up(n, t) - n128) <= max(128, n128 // 8)
        if waste_ok:
            best = t
        t *= 2
    return best


# ----------------------------- Pallas kernels ------------------------------ #

def _project_kernel(x_ref, w_ref, a2_ref, h_ref, s_ref):
    # One (fat) row tile: h = x @ W and the two attention projections
    # s[:, 0] = h . a_src, s[:, 1] = h . a_dst  (a2 is [F, 2]).
    h = jnp.dot(x_ref[...], w_ref[...], preferred_element_type=jnp.float32)
    h_ref[...] = h
    s_ref[...] = jnp.dot(h, a2_ref[...], preferred_element_type=jnp.float32)


def _attention_kernel(alpha, concat,
                      h_j_ref, s_src_ref, s_dst_ref, adj_ref,
                      out_ref, acc_ref, rowsum_ref):
    # Grid = (dest-row tile i [parallel], source-node tile j [arbitrary, last]).
    # Online accumulation of rowsum_i and sum_j e_ij * h_j across j tiles keeps
    # VMEM bounded regardless of N.
    j = pl.program_id(1)

    @pl.when(j == 0)
    def _():
        acc_ref[...] = jnp.zeros_like(acc_ref)
        rowsum_ref[...] = jnp.zeros_like(rowsum_ref)

    # score_ij = s_src_i + s_dst_j (precomputed columns, pure VPU broadcast add).
    score = s_src_ref[...] + s_dst_ref[...]                # [tm,1]+[1,tk] -> [tm,tk]
    lrelu = jnp.where(score > 0, score, alpha * score)
    # TODO(synk): exp(-leakyrelu) matches the PyTorch module exactly but is not
    # max-stabilized; extreme negative scores on existing edges can overflow.
    e = jnp.where(adj_ref[...] != 0, jnp.exp(-lrelu), 0.0)  # [tm, tk] f32

    rowsum_ref[...] += jnp.sum(e, axis=-1, keepdims=True)
    # Kept f32 (not bf16 MXU fast path) to stay within the 1e-4 reference
    # tolerance; flip e/h to bf16 with f32 accumulation if tolerance relaxes.
    acc_ref[...] += jnp.dot(e, h_j_ref[...], preferred_element_type=jnp.float32)

    @pl.when(j == pl.num_programs(1) - 1)
    def _():
        # Guard empty / padded rows (rowsum == 0) against 0/0 -> NaN: they
        # output 0 (deviation from PyTorch, which would emit NaN/inf).
        # Exact (refined) reciprocal on purpose: approx=True (~2^-12 rel err)
        # could brush the 1e-4 test tolerance.
        inv = pl.reciprocal(jnp.maximum(rowsum_ref[...], 1e-30))
        h_prime = acc_ref[...] * inv
        if concat:
            # ELU (alpha=1); clamp the unselected branch to avoid exp overflow.
            neg = jnp.exp(jnp.minimum(h_prime, 0.0)) - 1.0
            h_prime = jnp.where(h_prime > 0, h_prime, neg)
        out_ref[...] = h_prime


# ------------------------------ host wrapper ------------------------------- #

def sp_graph_attention_forward(x, adj, W, a, *, alpha=0.2, concat=True,
                               tm=None, tk=None):
    """Forward pass of SpGraphAttentionLayer.

    x:   [N, in_features]
    adj: [N, N]  (nonzero entries = edges; int8/uint8/bool preferred — avoids
                  an O(N^2) host-side conversion pass)
    W:   [in_features, out_features]
    a:   [1, 2*out_features]
    """
    N, fin = x.shape
    fout = W.shape[1]

    if tm is None:
        tm = _pick_row_tile(N)
    if tk is None:
        tk = _pick_col_tile(N)

    R = _round_up(N, tm)            # padded destination rows
    C = _round_up(N, tk)            # padded source columns (independent of R)
    P = _round_up(max(R, C), tm)    # rows the projection must cover (h feeds
                                    # both the source tiles and s_src/output)

    x32 = x.astype(jnp.float32)
    if P != N:
        x32 = jnp.pad(x32, ((0, P - N), (0, 0)))

    # adj: keep it narrow.  Callers already holding int8/uint8/bool skip the
    # 4*N^2-byte f32 read of a host-side conversion entirely.
    if adj.dtype in (jnp.int8, jnp.uint8):
        adj_i8 = adj
    elif adj.dtype == jnp.bool_:
        adj_i8 = adj.astype(jnp.int8)
    else:
        adj_i8 = (adj != 0).astype(jnp.int8)
    if adj_i8.shape != (R, C):
        adj_i8 = jnp.pad(adj_i8, ((0, R - N), (0, C - N)))

    W32 = W.astype(jnp.float32)
    # a2[:, 0] = a_src, a2[:, 1] = a_dst  (score projections folded into one dot).
    a2 = jnp.stack([a[0, :fout], a[0, fout:]], axis=1).astype(jnp.float32)

    # ---- projection: h = x @ W, s = h @ [a_src, a_dst]  (fat row tiles) ---- #
    tm_proj = P if P <= 1024 else tm
    h, s = pl.pallas_call(
        _project_kernel,
        out_shape=(jax.ShapeDtypeStruct((P, fout), jnp.float32),
                   jax.ShapeDtypeStruct((P, 2), jnp.float32)),
        grid=(P // tm_proj,),
        in_specs=[
            pl.BlockSpec((tm_proj, fin), lambda i: (i, 0)),
            pl.BlockSpec((fin, fout), lambda i: (0, 0)),
            pl.BlockSpec((fout, 2), lambda i: (0, 0)),
        ],
        out_specs=(pl.BlockSpec((tm_proj, fout), lambda i: (i, 0)),
                   pl.BlockSpec((tm_proj, 2), lambda i: (i, 0))),
        compiler_params=pltpu.CompilerParams(
            dimension_semantics=("parallel",)),
    )(x32, W32, a2)

    s_src = s[:, 0:1]            # [P, 1]  per-destination-row term
    s_dst_t = s[:, 1:2].T        # [1, P]  per-source-row term, pre-transposed

    # ---- masked attention with online accumulation over source tiles ---- #
    kernel = functools.partial(_attention_kernel, float(alpha), bool(concat))
    out = pl.pallas_call(
        kernel,
        out_shape=jax.ShapeDtypeStruct((R, fout), jnp.float32),
        grid=(R // tm, C // tk),
        in_specs=[
            pl.BlockSpec((tk, fout), lambda i, j: (j, 0)),    # h source tile
            pl.BlockSpec((tm, 1), lambda i, j: (i, 0)),       # s_src (dest rows)
            pl.BlockSpec((1, tk), lambda i, j: (0, j)),       # s_dst (src cols)
            pl.BlockSpec((tm, tk), lambda i, j: (i, j)),      # adj tile (int8)
        ],
        out_specs=pl.BlockSpec((tm, fout), lambda i, j: (i, 0)),
        scratch_shapes=[pltpu.VMEM((tm, fout), jnp.float32),  # acc of e @ h
                        pltpu.VMEM((tm, 1), jnp.float32)],    # rowsum
        compiler_params=pltpu.CompilerParams(
            dimension_semantics=("parallel", "arbitrary"),
            vmem_limit_bytes=32 * 1024 * 1024),
    )(h, s_src, s_dst_t, adj_i8)

    return out[:N]


# --------------------------- pure-JAX reference ----------------------------- #

def reference_forward(x, adj, W, a, *, alpha=0.2, concat=True):
    fout = W.shape[1]
    h = x @ W
    score = (h @ a[0, :fout])[:, None] + (h @ a[0, fout:])[None, :]
    lrelu = jnp.where(score > 0, score, alpha * score)
    e = jnp.where(adj != 0, jnp.exp(-lrelu), 0.0)
    rowsum = e.sum(axis=-1, keepdims=True)
    h_prime = (e @ h) / rowsum
    return jax.nn.elu(h_prime) if concat else h_prime


# ----------------------------------- main ----------------------------------- #

if __name__ == "__main__":
    N, in_features, out_features = 256, 32, 64
    alpha = 0.2
    concat = True

    key = jax.random.PRNGKey(0)
    kx, kw, ka, kadj = jax.random.split(key, 4)

    # Node features.
    x = jax.random.normal(kx, (N, in_features), dtype=jnp.float32)

    # Parameters, xavier_normal_ with gain=1.414 (matches nn.init.xavier_normal_).
    gain = 1.414
    w_std = gain * (2.0 / (in_features + out_features)) ** 0.5
    a_std = gain * (2.0 / (1 + 2 * out_features)) ** 0.5
    W = w_std * jax.random.normal(kw, (in_features, out_features), jnp.float32)
    a = a_std * jax.random.normal(ka, (1, 2 * out_features), jnp.float32)

    # Sparse-ish adjacency with self-loops (avoids empty rows), built directly
    # as int8 so the wrapper does no host-side O(N^2) conversion pass.
    adj_bool = jax.random.bernoulli(kadj, 0.3, (N, N)) | jnp.eye(N, dtype=bool)
    adj = adj_bool.astype(jnp.int8)

    out = sp_graph_attention_forward(x, adj, W, a, alpha=alpha, concat=concat)
    out = jax.block_until_ready(out)

    ref = reference_forward(x, adj, W, a, alpha=alpha, concat=concat)
    assert out.shape == (N, out_features)
    assert bool(jnp.all(jnp.isfinite(out)))
    assert jnp.allclose(out, ref, atol=1e-4, rtol=1e-4), (
        f"max abs err = {jnp.max(jnp.abs(out - ref))}")

    print("KERNEL_OK")
</pallas_src>

<mosaic_0001>
module attributes {stable_mosaic.version = 11 : i64} {
  func.func @_project_kernel(%arg0: i32, %arg1: memref<256x32xf32, #tpu.memory_space<vmem>>, %arg2: memref<32x64xf32, #tpu.memory_space<vmem>>, %arg3: memref<64x2xf32, #tpu.memory_space<vmem>>, %arg4: memref<256x64xf32, #tpu.memory_space<vmem>>, %arg5: memref<256x2xf32, #tpu.memory_space<vmem>>) attributes {dimension_semantics = [#tpu.dimension_semantics<parallel>], iteration_bounds = array<i64: 1>, scalar_prefetch = 0 : i64, scratch_operands = 0 : i64, tpu.core_type = #tpu.core_type<tc>, window_params = [{transform_indices = @transform_0, window_bounds = array<i64: 256, 32>}, {pipeline_mode = #tpu.pipeline_mode<synchronous>, transform_indices = @transform_1, window_bounds = array<i64: 32, 64>}, {pipeline_mode = #tpu.pipeline_mode<synchronous>, transform_indices = @transform_2, window_bounds = array<i64: 64, 2>}, {transform_indices = @transform_3, window_bounds = array<i64: 256, 64>}, {transform_indices = @transform_4, window_bounds = array<i64: 256, 2>}]} {
    %c0 = arith.constant 0 : index
    %c0_0 = arith.constant 0 : index
    %0 = vector.load %arg1[%c0, %c0_0] : memref<256x32xf32, #tpu.memory_space<vmem>>, vector<256x32xf32>
    %c0_1 = arith.constant 0 : index
    %c0_2 = arith.constant 0 : index
    %1 = vector.load %arg2[%c0_1, %c0_2] : memref<32x64xf32, #tpu.memory_space<vmem>>, vector<32x64xf32>
    %cst = arith.constant dense<0.000000e+00> : vector<256x64xf32>
    %2 = tpu.matmul %0, %1, %cst {dimension_numbers = #tpu.dot_dimension_numbers<[1], [0], [0], [1], [0, 0, 1, 1], [], []>} : vector<256x32xf32>, vector<32x64xf32>, vector<256x64xf32> -> vector<256x64xf32>
    %c0_3 = arith.constant 0 : index
    %c0_4 = arith.constant 0 : index
    %3 = vector.load %arg4[%c0_3, %c0_4] : memref<256x64xf32, #tpu.memory_space<vmem>>, vector<256x64xf32>
    tpu.vector_store %arg4[%c0_3, %c0_4], %2 {strides = array<i32>} : memref<256x64xf32, #tpu.memory_space<vmem>>, vector<256x64xf32>,
    %c0_5 = arith.constant 0 : index
    %c0_6 = arith.constant 0 : index
    %4 = vector.load %arg3[%c0_5, %c0_6] : memref<64x2xf32, #tpu.memory_space<vmem>>, vector<64x2xf32>
    %cst_7 = arith.constant dense<0.000000e+00> : vector<256x2xf32>
    %5 = tpu.matmul %2, %4, %cst_7 {dimension_numbers = #tpu.dot_dimension_numbers<[1], [0], [0], [1], [0, 0, 1, 1], [], []>} : vector<256x64xf32>, vector<64x2xf32>, vector<256x2xf32> -> vector<256x2xf32>
    %c0_8 = arith.constant 0 : index
    %c0_9 = arith.constant 0 : index
    %6 = vector.load %arg5[%c0_8, %c0_9] : memref<256x2xf32, #tpu.memory_space<vmem>>, vector<256x2xf32>
    tpu.vector_store %arg5[%c0_8, %c0_9], %5 {strides = array<i32>} : memref<256x2xf32, #tpu.memory_space<vmem>>, vector<256x2xf32>,
    return
  }
  func.func @transform_0(%arg0: i32) -> (i32, i32) {
    %c0_i32 = arith.constant 0 : i32
    %c0_i32_0 = arith.constant 0 : i32
    return %arg0, %c0_i32 : i32, i32
  }
  func.func @transform_1(%arg0: i32) -> (i32, i32) {
    %c0_i32 = arith.constant 0 : i32
    %c0_i32_0 = arith.constant 0 : i32
    %c0_i32_1 = arith.constant 0 : i32
    return %c0_i32, %c0_i32_0 : i32, i32
  }
  func.func @transform_2(%arg0: i32) -> (i32, i32) {
    %c0_i32 = arith.constant 0 : i32
    %c0_i32_0 = arith.constant 0 : i32
    %c0_i32_1 = arith.constant 0 : i32
    return %c0_i32, %c0_i32_0 : i32, i32
  }
  func.func @transform_3(%arg0: i32) -> (i32, i32) {
    %c0_i32 = arith.constant 0 : i32
    %c0_i32_0 = arith.constant 0 : i32
    return %arg0, %c0_i32 : i32, i32
  }
  func.func @transform_4(%arg0: i32) -> (i32, i32) {
    %c0_i32 = arith.constant 0 : i32
    %c0_i32_0 = arith.constant 0 : i32
    return %arg0, %c0_i32 : i32, i32
  }
}

</mosaic_0001>

<llo_original>
// kernel: tpu_custom_call.1
$region0: #{tpu_custom_call.1}
  #allocation0 [shape = 'u32[]', space=smem, size = 0x4, offset = 0x4, fixed_abs, tag = 'smem constant byte address 0x4 - core index']
  #allocation1 [shape = 'u32[144,128]{1,0:T(1,128)}', space=vmem, size = 0x12000, scoped, tag = 'internal scratch']
  %s0 = inlined_call_operand.vmem [shape: f32[256,32], index: 0, kind: input, shape index: {}]
  %s1 = inlined_call_operand.vmem [shape: f32[32,64], index: 1, kind: input, shape index: {}]
  %s2 = inlined_call_operand.vmem [shape: f32[64,2], index: 2, kind: input, shape index: {}]
  %s3 = inlined_call_operand.vmem [shape: f32[256,64], index: 3, kind: output, shape index: {0}]
  %s4 = inlined_call_operand.vmem [shape: f32[256,2], index: 4, kind: output, shape index: {1}]
  %5 = xla_tuple %s3, %s4
  %s6 = sld [smem:[#allocation0]]
  $region30: #{tpu_custom_call.1} parent=0
    _
  %s8 = ssub.s32 1, %s6
  %s9 = scalar_select 0, %s8, %s6
  // Predicated region
  $region2: #{tpu_custom_call.1} parent=0 // pred_check
    _
  $region3: #{tpu_custom_call.1} parent=0 // pred_check_branch
    %11 = sbr.rel (0) target = $region5
  $region4: #{tpu_custom_call.1} parent=0 // pred_region
    _
  $region5: #{tpu_custom_call.1} parent=0 // pred_fallthru
    _
  // Predicated region
  $region6: #{tpu_custom_call.1} parent=0 // pred_check
    _
  $region7: #{tpu_custom_call.1} parent=0 // pred_check_branch
    %13 = sbr.rel (0) target = $region9
  $region8: #{tpu_custom_call.1} parent=0 // pred_region
    _
  $region9: #{tpu_custom_call.1} parent=0 // pred_fallthru
    _
  // Predicated region
  $region10: #{tpu_custom_call.1} parent=0 // pred_check
    _
  $region11: #{tpu_custom_call.1} parent=0 // pred_check_branch
    %15 = sbr.rel (0) target = $region13
  $region12: #{tpu_custom_call.1} parent=0 // pred_region
    _
  $region13: #{tpu_custom_call.1} parent=0 // pred_fallthru
    _
  %v16 = vld [vmem:[%s0] sm:$0xff]
  %v17 = vld [vmem:[%s0 + $0x8] sm:$0xff]
  %v18 = vld [vmem:[%s0 + $0x10] sm:$0xff]
  %v19 = vld [vmem:[%s0 + $0x18] sm:$0xff]
  %v20 = vld [vmem:[%s0 + $0x20] sm:$0xff]
  %v21 = vld [vmem:[%s0 + $0x28] sm:$0xff]
  %v22 = vld [vmem:[%s0 + $0x30] sm:$0xff]
  %v23 = vld [vmem:[%s0 + $0x38] sm:$0xff]
  %v24 = vld [vmem:[%s0 + $0x40] sm:$0xff]
  %v25 = vld [vmem:[%s0 + $0x48] sm:$0xff]
  %v26 = vld [vmem:[%s0 + $0x50] sm:$0xff]
  %v27 = vld [vmem:[%s0 + $0x58] sm:$0xff]
  %v28 = vld [vmem:[%s0 + $0x60] sm:$0xff]
  %v29 = vld [vmem:[%s0 + $0x68] sm:$0xff]
  %v30 = vld [vmem:[%s0 + $0x70] sm:$0xff]
  %v31 = vld [vmem:[%s0 + $0x78] sm:$0xff]
  %v32 = vld [vmem:[%s0 + $0x80] sm:$0xff]
  %v33 = vld [vmem:[%s0 + $0x88] sm:$0xff]
  %v34 = vld [vmem:[%s0 + $0x90] sm:$0xff]
  %v35 = vld [vmem:[%s0 + $0x98] sm:$0xff]
  %v36 = vld [vmem:[%s0 + $0xa0] sm:$0xff]
  %v37 = vld [vmem:[%s0 + $0xa8] sm:$0xff]
  %v38 = vld [vmem:[%s0 + $0xb0] sm:$0xff]
  %v39 = vld [vmem:[%s0 + $0xb8] sm:$0xff]
  %v40 = vld [vmem:[%s0 + $0xc0] sm:$0xff]
  %v41 = vld [vmem:[%s0 + $0xc8] sm:$0xff]
  %v42 = vld [vmem:[%s0 + $0xd0] sm:$0xff]
  %v43 = vld [vmem:[%s0 + $0xd8] sm:$0xff]
  %v44 = vld [vmem:[%s0 + $0xe0] sm:$0xff]
  %v45 = vld [vmem:[%s0 + $0xe8] sm:$0xff]
  %v46 = vld [vmem:[%s0 + $0xf0] sm:$0xff]
  %v47 = vld [vmem:[%s0 + $0xf8] sm:$0xff]
  %v48 = vld [vmem:[%s1] sm:$0xff]
  %v49 = vld [vmem:[%s1 + $0x8] sm:$0xff]
  %v50 = vld [vmem:[%s1 + $0x10] sm:$0xff]
  %v51 = vld [vmem:[%s1 + $0x18] sm:$0xff]
  %vm52 = vcmask 261120
  %v54 = vsel %vm52, %v16, 0
  %v57 = vsel %vm52, %v17, 0
  %v60 = vsel %vm52, %v18, 0
  %v63 = vsel %vm52, %v19, 0
  %v66 = vsel %vm52, %v20, 0
  %v69 = vsel %vm52, %v21, 0
  %v72 = vsel %vm52, %v22, 0
  %v75 = vsel %vm52, %v23, 0
  %v78 = vsel %vm52, %v24, 0
  %v81 = vsel %vm52, %v25, 0
  %v84 = vsel %vm52, %v26, 0
  %v87 = vsel %vm52, %v27, 0
  %v90 = vsel %vm52, %v28, 0
  %v93 = vsel %vm52, %v29, 0
  %v96 = vsel %vm52, %v30, 0
  %v99 = vsel %vm52, %v31, 0
  %v102 = vsel %vm52, %v32, 0
  %v105 = vsel %vm52, %v33, 0
  %v108 = vsel %vm52, %v34, 0
  %v111 = vsel %vm52, %v35, 0
  %v114 = vsel %vm52, %v36, 0
  %v117 = vsel %vm52, %v37, 0
  %v120 = vsel %vm52, %v38, 0
  %v123 = vsel %vm52, %v39, 0
  %v126 = vsel %vm52, %v40, 0
  %v129 = vsel %vm52, %v41, 0
  %v132 = vsel %vm52, %v42, 0
  %v135 = vsel %vm52, %v43, 0
  %v138 = vsel %vm52, %v44, 0
  %v141 = vsel %vm52, %v45, 0
  %v144 = vsel %vm52, %v46, 0
  %v147 = vsel %vm52, %v47, 0
  %149 = vmatprep.subr.mxu0 0.0
  %150 = vmatpush1.msra.mxu0 %v48
  %151 = vmatprep.subr.mxu0 0.0
  %152 = vmatpush1.msra.mxu0 %v49
  %153 = vmatprep.subr.mxu0 0.0
  %154 = vmatpush1.msra.mxu0 %v50
  %155 = vmatprep.subr.mxu0 0.0
  %156 = vmatpush1.msra.mxu0 %v51
  %157 = vmatprep.subr.mxu0 0.0
  %158 = vmatpush1.msra.mxu0 0.0
  %159 = vmatprep.subr.mxu0 0.0
  %160 = vmatpush1.msra.mxu0 0.0
  %161 = vmatprep.subr.mxu0 0.0
  %162 = vmatpush1.msra.mxu0 0.0
  %163 = vmatprep.subr.mxu0 0.0
  %164 = vmatpush1.msra.mxu0 0.0
  %165 = vmatprep.subr.mxu0 0.0
  %166 = vmatpush1.msra.mxu0 0.0
  %167 = vmatprep.subr.mxu0 0.0
  %168 = vmatpush1.msra.mxu0 0.0
  %169 = vmatprep.subr.mxu0 0.0
  %170 = vmatpush1.msra.mxu0 0.0
  %171 = vmatprep.subr.mxu0 0.0
  %172 = vmatpush1.msra.mxu0 0.0
  %173 = vmatprep.subr.mxu0 0.0
  %174 = vmatpush1.msra.mxu0 0.0
  %175 = vmatprep.subr.mxu0 0.0
  %176 = vmatpush1.msra.mxu0 0.0
  %177 = vmatprep.subr.mxu0 0.0
  %178 = vmatpush1.msra.mxu0 0.0
  %179 = vmatprep.subr.mxu0 0.0
  %180 = vmatpush1.msra.mxu0 0.0
  %181 = vmatprep.subr.mxu0 0.0
  %182 = vmatpush1.msra.mxu0 0.0
  %183 = vmatprep.subr.mxu0 0.0
  %184 = vmatpush1.msra.mxu0 0.0
  %185 = vmatprep.subr.mxu0 0.0
  %186 = vmatpush1.msra.mxu0 0.0
  %187 = vmatprep.subr.mxu0 0.0
  %188 = vmatpush1.msra.mxu0 0.0
  %189 = vmatprep.subr.mxu0 0.0
  %190 = vmatpush1.msra.mxu0 0.0
  %191 = vmatprep.subr.mxu0 0.0
  %192 = vmatpush1.msra.mxu0 0.0
  %193 = vmatprep.subr.mxu0 0.0
  %194 = vmatpush1.msra.mxu0 0.0
  %195 = vmatprep.subr.mxu0 0.0
  %196 = vmatpush1.msra.mxu0 0.0
  %197 = vmatprep.subr.mxu0 0.0
  %198 = vmatpush1.msra.mxu0 0.0
  %199 = vmatprep.subr.mxu0 0.0
  %200 = vmatpush1.msra.mxu0 0.0
  %201 = vmatprep.subr.mxu0 0.0
  %202 = vmatpush1.msra.mxu0 0.0
  %203 = vmatprep.subr.mxu0 0.0
  %204 = vmatpush1.msra.mxu0 0.0
  %205 = vmatprep.subr.mxu0 0.0
  %206 = vmatpush1.msra.mxu0 0.0
  %207 = vmatprep.subr.mxu0 0.0
  %208 = vmatpush1.msra.mxu0 0.0
  %209 = vmatprep.subr.mxu0 0.0
  %210 = vmatpush1.msra.mxu0 0.0
  %211 = vmatprep.subr.mxu0 0.0
  %212 = vmatpush1.msra.mxu0 0.0
  %213 = vmatprep.mubr.f32.mxu0 0.0
  %214 = vmatmul.mubr.f32.gmra.mrb[0].mxu0 %v54
  %v215 = vpop.f32.mrb[0].mxu0
  %v216 = vadd.f32 0.0, %v215
  %v217 = vpop.f32.mrb[0].mxu0
  %218 = vmatprep.mubr.f32.mxu0 0.0
  %219 = vmatmul.mubr.f32.gmra.mrb[0].mxu0 %v57
  %v220 = vpop.f32.mrb[0].mxu0
  %v221 = vadd.f32 0.0, %v220
  %v222 = vpop.f32.mrb[0].mxu0
  %223 = vmatprep.mubr.f32.mxu0 0.0
  %224 = vmatmul.mubr.f32.gmra.mrb[0].mxu0 %v60
  %v225 = vpop.f32.mrb[0].mxu0
  %v226 = vadd.f32 0.0, %v225
  %v227 = vpop.f32.mrb[0].mxu0
  %228 = vmatprep.mubr.f32.mxu0 0.0
  %229 = vmatmul.mubr.f32.gmra.mrb[0].mxu0 %v63
  %v230 = vpop.f32.mrb[0].mxu0
  %v231 = vadd.f32 0.0, %v230
  %v232 = vpop.f32.mrb[0].mxu0
  %233 = vmatprep.mubr.f32.mxu0 0.0
  %234 = vmatmul.mubr.f32.gmra.mrb[0].mxu0 %v66
  %v235 = vpop.f32.mrb[0].mxu0
  %v236 = vadd.f32 0.0, %v235
  %v237 = vpop.f32.mrb[0].mxu0
  %238 = vmatprep.mubr.f32.mxu0 0.0
  %239 = vmatmul.mubr.f32.gmra.mrb[0].mxu0 %v69
  %v240 = vpop.f32.mrb[0].mxu0
  %v241 = vadd.f32 0.0, %v240
  %v242 = vpop.f32.mrb[0].mxu0
  %243 = vmatprep.mubr.f32.mxu0 0.0
  %244 = vmatmul.mubr.f32.gmra.mrb[0].mxu0 %v72
  %v245 = vpop.f32.mrb[0].mxu0
  %v246 = vadd.f32 0.0, %v245
  %v247 = vpop.f32.mrb[0].mxu0
  %248 = vmatprep.mubr.f32.mxu0 0.0
  %249 = vmatmul.mubr.f32.gmra.mrb[0].mxu0 %v75
  %v250 = vpop.f32.mrb[0].mxu0
  %v251 = vadd.f32 0.0, %v250
  %v252 = vpop.f32.mrb[0].mxu0
  %253 = vmatprep.mubr.f32.mxu0 0.0
  %254 = vmatmul.mubr.f32.gmra.mrb[0].mxu0 %v78
  %v255 = vpop.f32.mrb[0].mxu0
  %v256 = vadd.f32 0.0, %v255
  %v257 = vpop.f32.mrb[0].mxu0
  %258 = vmatprep.mubr.f32.mxu0 0.0
  %259 = vmatmul.mubr.f32.gmra.mrb[0].mxu0 %v81
  %v260 = vpop.f32.mrb[0].mxu0
  %v261 = vadd.f32 0.0, %v260
  %v262 = vpop.f32.mrb[0].mxu0
  %263 = vmatprep.mubr.f32.mxu0 0.0
  %264 = vmatmul.mubr.f32.gmra.mrb[0].mxu0 %v84
  %v265 = vpop.f32.mrb[0].mxu0
  %v266 = vadd.f32 0.0, %v265
  %v267 = vpop.f32.mrb[0].mxu0
  %268 = vmatprep.mubr.f32.mxu0 0.0
  %269 = vmatmul.mubr.f32.gmra.mrb[0].mxu0 %v87
  %v270 = vpop.f32.mrb[0].mxu0
  %v271 = vadd.f32 0.0, %v270
  %v272 = vpop.f32.mrb[0].mxu0
  %273 = vmatprep.mubr.f32.mxu0 0.0
  %274 = vmatmul.mubr.f32.gmra.mrb[0].mxu0 %v90
  %v275 = vpop.f32.mrb[0].mxu0
  %v276 = vadd.f32 0.0, %v275
  %v277 = vpop.f32.mrb[0].mxu0
  %278 = vmatprep.mubr.f32.mxu0 0.0
  %279 = vmatmul.mubr.f32.gmra.mrb[0].mxu0 %v93
  %v280 = vpop.f32.mrb[0].mxu0
  %v281 = vadd.f32 0.0, %v280
  %v282 = vpop.f32.mrb[0].mxu0
  %283 = vmatprep.mubr.f32.mxu0 0.0
  %284 = vmatmul.mubr.f32.gmra.mrb[0].mxu0 %v96
  %v285 = vpop.f32.mrb[0].mxu0
  %v286 = vadd.f32 0.0, %v285
  %v287 = vpop.f32.mrb[0].mxu0
  %288 = vmatprep.mubr.f32.mxu0 0.0
  %289 = vmatmul.mubr.f32.gmra.mrb[0].mxu0 %v99
  %v290 = vpop.f32.mrb[0].mxu0
  %v291 = vadd.f32 0.0, %v290
  %v292 = vpop.f32.mrb[0].mxu0
  %293 = vmatprep.mubr.f32.mxu0 0.0
  %294 = vmatmul.mubr.f32.gmra.mrb[0].mxu0 %v102
  %v295 = vpop.f32.mrb[0].mxu0
  %v296 = vadd.f32 0.0, %v295
  %v297 = vpop.f32.mrb[0].mxu0
  %298 = vmatprep.mubr.f32.mxu0 0.0
  %299 = vmatmul.mubr.f32.gmra.mrb[0].mxu0 %v105
  %v300 = vpop.f32.mrb[0].mxu0
  %v301 = vadd.f32 0.0, %v300
  %v302 = vpop.f32.mrb[0].mxu0
  %303 = vmatprep.mubr.f32.mxu0 0.0
  %304 = vmatmul.mubr.f32.gmra.mrb[0].mxu0 %v108
  %v305 = vpop.f32.mrb[0].mxu0
  %v306 = vadd.f32 0.0, %v305
  %v307 = vpop.f32.mrb[0].mxu0
  %308 = vmatprep.mubr.f32.mxu0 0.0
  %309 = vmatmul.mubr.f32.gmra.mrb[0].mxu0 %v111
  %v310 = vpop.f32.mrb[0].mxu0
  %v311 = vadd.f32 0.0, %v310
  %v312 = vpop.f32.mrb[0].mxu0
  %313 = vmatprep.mubr.f32.mxu0 0.0
  %314 = vmatmul.mubr.f32.gmra.mrb[0].mxu0 %v114
  %v315 = vpop.f32.mrb[0].mxu0
  %v316 = vadd.f32 0.0, %v315
  %v317 = vpop.f32.mrb[0].mxu0
  %318 = vmatprep.mubr.f32.mxu0 0.0
  %319 = vmatmul.mubr.f32.gmra.mrb[0].mxu0 %v117
  %v320 = vpop.f32.mrb[0].mxu0
  %v321 = vadd.f32 0.0, %v320
  %v322 = vpop.f32.mrb[0].mxu0
  %323 = vmatprep.mubr.f32.mxu0 0.0
  %324 = vmatmul.mubr.f32.gmra.mrb[0].mxu0 %v120
  %v325 = vpop.f32.mrb[0].mxu0
  %v326 = vadd.f32 0.0, %v325
  %v327 = vpop.f32.mrb[0].mxu0
  %328 = vmatprep.mubr.f32.mxu0 0.0
  %329 = vmatmul.mubr.f32.gmra.mrb[0].mxu0 %v123
  %v330 = vpop.f32.mrb[0].mxu0
  %v331 = vadd.f32 0.0, %v330
  %v332 = vpop.f32.mrb[0].mxu0
  %333 = vmatprep.mubr.f32.mxu0 0.0
  %334 = vmatmul.mubr.f32.gmra.mrb[0].mxu0 %v126
  %v335 = vpop.f32.mrb[0].mxu0
  %v336 = vadd.f32 0.0, %v335
  %v337 = vpop.f32.mrb[0].mxu0
  %338 = vmatprep.mubr.f32.mxu0 0.0
  %339 = vmatmul.mubr.f32.gmra.mrb[0].mxu0 %v129
  %v340 = vpop.f32.mrb[0].mxu0
  %v341 = vadd.f32 0.0, %v340
  %v342 = vpop.f32.mrb[0].mxu0
  %343 = vmatprep.mubr.f32.mxu0 0.0
  %344 = vmatmul.mubr.f32.gmra.mrb[0].mxu0 %v132
  %v345 = vpop.f32.mrb[0].mxu0
  %v346 = vadd.f32 0.0, %v345
  %v347 = vpop.f32.mrb[0].mxu0
  %348 = vmatprep.mubr.f32.mxu0 0.0
  %349 = vmatmul.mubr.f32.gmra.mrb[0].mxu0 %v135
  %v350 = vpop.f32.mrb[0].mxu0
  %v351 = vadd.f32 0.0, %v350
  %v352 = vpop.f32.mrb[0].mxu0
  %353 = vmatprep.mubr.f32.mxu0 0.0
  %354 = vmatmul.mubr.f32.gmra.mrb[0].mxu0 %v138
  %v355 = vpop.f32.mrb[0].mxu0
  %v356 = vadd.f32 0.0, %v355
  %v357 = vpop.f32.mrb[0].mxu0
  %358 = vmatprep.mubr.f32.mxu0 0.0
  %359 = vmatmul.mubr.f32.gmra.mrb[0].mxu0 %v141
  %v360 = vpop.f32.mrb[0].mxu0
  %v361 = vadd.f32 0.0, %v360
  %v362 = vpop.f32.mrb[0].mxu0
  %363 = vmatprep.mubr.f32.mxu0 0.0
  %364 = vmatmul.mubr.f32.gmra.mrb[0].mxu0 %v144
  %v365 = vpop.f32.mrb[0].mxu0
  %v366 = vadd.f32 0.0, %v365
  %v367 = vpop.f32.mrb[0].mxu0
  %368 = vmatprep.mubr.f32.mxu0 0.0
  %369 = vmatmul.mubr.f32.gmra.mrb[0].mxu0 %v147
  %v370 = vpop.f32.mrb[0].mxu0
  %v371 = vadd.f32 0.0, %v370
  %v372 = vpop.f32.mrb[0].mxu0
  %373 = vdwg.mxu0
  %vm374 = vcmask 523264
  %375 = vst.msk [vmem:[%s3] sm:$0xff] %vm374, %v216
  %376 = vst.msk [vmem:[%s3 + $0x8] sm:$0xff] %vm374, %v221
  %377 = vst.msk [vmem:[%s3 + $0x10] sm:$0xff] %vm374, %v226
  %378 = vst.msk [vmem:[%s3 + $0x18] sm:$0xff] %vm374, %v231
  %379 = vst.msk [vmem:[%s3 + $0x20] sm:$0xff] %vm374, %v236
  %380 = vst.msk [vmem:[%s3 + $0x28] sm:$0xff] %vm374, %v241
  %381 = vst.msk [vmem:[%s3 + $0x30] sm:$0xff] %vm374, %v246
  %382 = vst.msk [vmem:[%s3 + $0x38] sm:$0xff] %vm374, %v251
  %383 = vst.msk [vmem:[%s3 + $0x40] sm:$0xff] %vm374, %v256
  %384 = vst.msk [vmem:[%s3 + $0x48] sm:$0xff] %vm374, %v261
  %385 = vst.msk [vmem:[%s3 + $0x50] sm:$0xff] %vm374, %v266
  %386 = vst.msk [vmem:[%s3 + $0x58] sm:$0xff] %vm374, %v271
  %387 = vst.msk [vmem:[%s3 + $0x60] sm:$0xff] %vm374, %v276
  %388 = vst.msk [vmem:[%s3 + $0x68] sm:$0xff] %vm374, %v281
  %389 = vst.msk [vmem:[%s3 + $0x70] sm:$0xff] %vm374, %v286
  %390 = vst.msk [vmem:[%s3 + $0x78] sm:$0xff] %vm374, %v291
  %391 = vst.msk [vmem:[%s3 + $0x80] sm:$0xff] %vm374, %v296
  %392 = vst.msk [vmem:[%s3 + $0x88] sm:$0xff] %vm374, %v301
  %393 = vst.msk [vmem:[%s3 + $0x90] sm:$0xff] %vm374, %v306
  %394 = vst.msk [vmem:[%s3 + $0x98] sm:$0xff] %vm374, %v311
  %395 = vst.msk [vmem:[%s3 + $0xa0] sm:$0xff] %vm374, %v316
  %396 = vst.msk [vmem:[%s3 + $0xa8] sm:$0xff] %vm374, %v321
  %397 = vst.msk [vmem:[%s3 + $0xb0] sm:$0xff] %vm374, %v326
  %398 = vst.msk [vmem:[%s3 + $0xb8] sm:$0xff] %vm374, %v331
  %399 = vst.msk [vmem:[%s3 + $0xc0] sm:$0xff] %vm374, %v336
  %400 = vst.msk [vmem:[%s3 + $0xc8] sm:$0xff] %vm374, %v341
  %401 = vst.msk [vmem:[%s3 + $0xd0] sm:$0xff] %vm374, %v346
  %402 = vst.msk [vmem:[%s3 + $0xd8] sm:$0xff] %vm374, %v351
  %403 = vst.msk [vmem:[%s3 + $0xe0] sm:$0xff] %vm374, %v356
  %404 = vst.msk [vmem:[%s3 + $0xe8] sm:$0xff] %vm374, %v361
  %405 = vst.msk [vmem:[%s3 + $0xf0] sm:$0xff] %vm374, %v366
  %406 = vst.msk [vmem:[%s3 + $0xf8] sm:$0xff] %vm374, %v371
  %v407 = vld [vmem:[%s2] sm:$0xff]
  %v408 = vld [vmem:[%s2 + $0x8] sm:$0xff]
  %v409 = vld [vmem:[%s2 + $0x10] sm:$0xff]
  %v410 = vld [vmem:[%s2 + $0x18] sm:$0xff]
  %v411 = vld [vmem:[%s2 + $0x20] sm:$0xff]
  %v412 = vld [vmem:[%s2 + $0x28] sm:$0xff]
  %v413 = vld [vmem:[%s2 + $0x30] sm:$0xff]
  %v414 = vld [vmem:[%s2 + $0x38] sm:$0xff]
  %v416 = vsel %vm374, %v216, 0
  %v419 = vsel %vm374, %v221, 0
  %v422 = vsel %vm374, %v226, 0
  %v425 = vsel %vm374, %v231, 0
  %v428 = vsel %vm374, %v236, 0
  %v431 = vsel %vm374, %v241, 0
  %v434 = vsel %vm374, %v246, 0
  %v437 = vsel %vm374, %v251, 0
  %v440 = vsel %vm374, %v256, 0
  %v443 = vsel %vm374, %v261, 0
  %v446 = vsel %vm374, %v266, 0
  %v449 = vsel %vm374, %v271, 0
  %v452 = vsel %vm374, %v276, 0
  %v455 = vsel %vm374, %v281, 0
  %v458 = vsel %vm374, %v286, 0
  %v461 = vsel %vm374, %v291, 0
  %v464 = vsel %vm374, %v296, 0
  %v467 = vsel %vm374, %v301, 0
  %v470 = vsel %vm374, %v306, 0
  %v473 = vsel %vm374, %v311, 0
  %v476 = vsel %vm374, %v316, 0
  %v479 = vsel %vm374, %v321, 0
  %v482 = vsel %vm374, %v326, 0
  %v485 = vsel %vm374, %v331, 0
  %v488 = vsel %vm374, %v336, 0
  %v491 = vsel %vm374, %v341, 0
  %v494 = vsel %vm374, %v346, 0
  %v497 = vsel %vm374, %v351, 0
  %v500 = vsel %vm374, %v356, 0
  %v503 = vsel %vm374, %v361, 0
  %v506 = vsel %vm374, %v366, 0
  %v509 = vsel %vm374, %v371, 0
  %511 = vmatprep.subr.mxu0 0.0
  %512 = vmatpush1.msra.mxu0 %v407
  %513 = vmatprep.subr.mxu0 0.0
  %514 = vmatpush1.msra.mxu0 %v408
  %515 = vmatprep.subr.mxu0 0.0
  %516 = vmatpush1.msra.mxu0 %v409
  %517 = vmatprep.subr.mxu0 0.0
  %518 = vmatpush1.msra.mxu0 %v410
  %519 = vmatprep.subr.mxu0 0.0
  %520 = vmatpush1.msra.mxu0 %v411
  %521 = vmatprep.subr.mxu0 0.0
  %522 = vmatpush1.msra.mxu0 %v412
  %523 = vmatprep.subr.mxu0 0.0
  %524 = vmatpush1.msra.mxu0 %v413
  %525 = vmatprep.subr.mxu0 0.0
  %526 = vmatpush1.msra.mxu0 %v414
  %527 = vmatprep.subr.mxu0 0.0
  %528 = vmatpush1.msra.mxu0 0.0
  %529 = vmatprep.subr.mxu0 0.0
  %530 = vmatpush1.msra.mxu0 0.0
  %531 = vmatprep.subr.mxu0 0.0
  %532 = vmatpush1.msra.mxu0 0.0
  %533 = vmatprep.subr.mxu0 0.0
  %534 = vmatpush1.msra.mxu0 0.0
  %535 = vmatprep.subr.mxu0 0.0
  %536 = vmatpush1.msra.mxu0 0.0
  %537 = vmatprep.subr.mxu0 0.0
  %538 = vmatpush1.msra.mxu0 0.0
  %539 = vmatprep.subr.mxu0 0.0
  %540 = vmatpush1.msra.mxu0 0.0
  %541 = vmatprep.subr.mxu0 0.0
  %542 = vmatpush1.msra.mxu0 0.0
  %543 = vmatprep.subr.mxu0 0.0
  %544 = vmatpush1.msra.mxu0 0.0
  %545 = vmatprep.subr.mxu0 0.0
  %546 = vmatpush1.msra.mxu0 0.0
  %547 = vmatprep.subr.mxu0 0.0
  %548 = vmatpush1.msra.mxu0 0.0
  %549 = vmatprep.subr.mxu0 0.0
  %550 = vmatpush1.msra.mxu0 0.0
  %551 = vmatprep.subr.mxu0 0.0
  %552 = vmatpush1.msra.mxu0 0.0
  %553 = vmatprep.subr.mxu0 0.0
  %554 = vmatpush1.msra.mxu0 0.0
  %555 = vmatprep.subr.mxu0 0.0
  %556 = vmatpush1.msra.mxu0 0.0
  %557 = vmatprep.subr.mxu0 0.0
  %558 = vmatpush1.msra.mxu0 0.0
  %559 = vmatprep.subr.mxu0 0.0
  %560 = vmatpush1.msra.mxu0 0.0
  %561 = vmatprep.subr.mxu0 0.0
  %562 = vmatpush1.msra.mxu0 0.0
  %563 = vmatprep.subr.mxu0 0.0
  %564 = vmatpush1.msra.mxu0 0.0
  %565 = vmatprep.subr.mxu0 0.0
  %566 = vmatpush1.msra.mxu0 0.0
  %567 = vmatprep.subr.mxu0 0.0
  %568 = vmatpush1.msra.mxu0 0.0
  %569 = vmatprep.subr.mxu0 0.0
  %570 = vmatpush1.msra.mxu0 0.0
  %571 = vmatprep.subr.mxu0 0.0
  %572 = vmatpush1.msra.mxu0 0.0
  %573 = vmatprep.subr.mxu0 0.0
  %574 = vmatpush1.msra.mxu0 0.0
  %575 = vmatprep.mubr.f32.mxu0 0.0
  %576 = vmatmul.mubr.f32.gmra.mrb[0].mxu0 %v416
  %v577 = vpop.f32.mrb[0].mxu0
  %v578 = vadd.f32 0.0, %v577
  %v579 = vpop.f32.mrb[0].mxu0
  %580 = vmatprep.mubr.f32.mxu0 0.0
  %581 = vmatmul.mubr.f32.gmra.mrb[0].mxu0 %v419
  %v582 = vpop.f32.mrb[0].mxu0
  %v583 = vadd.f32 0.0, %v582
  %v584 = vpop.f32.mrb[0].mxu0
  %585 = vmatprep.mubr.f32.mxu0 0.0
  %586 = vmatmul.mubr.f32.gmra.mrb[0].mxu0 %v422
  %v587 = vpop.f32.mrb[0].mxu0
  %v588 = vadd.f32 0.0, %v587
  %v589 = vpop.f32.mrb[0].mxu0
  %590 = vmatprep.mubr.f32.mxu0 0.0
  %591 = vmatmul.mubr.f32.gmra.mrb[0].mxu0 %v425
  %v592 = vpop.f32.mrb[0].mxu0
  %v593 = vadd.f32 0.0, %v592
  %v594 = vpop.f32.mrb[0].mxu0
  %595 = vmatprep.mubr.f32.mxu0 0.0
  %596 = vmatmul.mubr.f32.gmra.mrb[0].mxu0 %v428
  %v597 = vpop.f32.mrb[0].mxu0
  %v598 = vadd.f32 0.0, %v597
  %v599 = vpop.f32.mrb[0].mxu0
  %600 = vmatprep.mubr.f32.mxu0 0.0
  %601 = vmatmul.mubr.f32.gmra.mrb[0].mxu0 %v431
  %v602 = vpop.f32.mrb[0].mxu0
  %v603 = vadd.f32 0.0, %v602
  %v604 = vpop.f32.mrb[0].mxu0
  %605 = vmatprep.mubr.f32.mxu0 0.0
  %606 = vmatmul.mubr.f32.gmra.mrb[0].mxu0 %v434
  %v607 = vpop.f32.mrb[0].mxu0
  %v608 = vadd.f32 0.0, %v607
  %v609 = vpop.f32.mrb[0].mxu0
  %610 = vmatprep.mubr.f32.mxu0 0.0
  %611 = vmatmul.mubr.f32.gmra.mrb[0].mxu0 %v437
  %v612 = vpop.f32.mrb[0].mxu0
  %v613 = vadd.f32 0.0, %v612
  %v614 = vpop.f32.mrb[0].mxu0
  %615 = vmatprep.mubr.f32.mxu0 0.0
  %616 = vmatmul.mubr.f32.gmra.mrb[0].mxu0 %v440
  %v617 = vpop.f32.mrb[0].mxu0
  %v618 = vadd.f32 0.0, %v617
  %v619 = vpop.f32.mrb[0].mxu0
  %620 = vmatprep.mubr.f32.mxu0 0.0
  %621 = vmatmul.mubr.f32.gmra.mrb[0].mxu0 %v443
  %v622 = vpop.f32.mrb[0].mxu0
  %v623 = vadd.f32 0.0, %v622
  %v624 = vpop.f32.mrb[0].mxu0
  %625 = vmatprep.mubr.f32.mxu0 0.0
  %626 = vmatmul.mubr.f32.gmra.mrb[0].mxu0 %v446
  %v627 = vpop.f32.mrb[0].mxu0
  %v628 = vadd.f32 0.0, %v627
  %v629 = vpop.f32.mrb[0].mxu0
  %630 = vmatprep.mubr.f32.mxu0 0.0
  %631 = vmatmul.mubr.f32.gmra.mrb[0].mxu0 %v449
  %v632 = vpop.f32.mrb[0].mxu0
  %v633 = vadd.f32 0.0, %v632
  %v634 = vpop.f32.mrb[0].mxu0
  %635 = vmatprep.mubr.f32.mxu0 0.0
  %636 = vmatmul.mubr.f32.gmra.mrb[0].mxu0 %v452
  %v637 = vpop.f32.mrb[0].mxu0
  %v638 = vadd.f32 0.0, %v637
  %v639 = vpop.f32.mrb[0].mxu0
  %640 = vmatprep.mubr.f32.mxu0 0.0
  %641 = vmatmul.mubr.f32.gmra.mrb[0].mxu0 %v455
  %v642 = vpop.f32.mrb[0].mxu0
  %v643 = vadd.f32 0.0, %v642
  %v644 = vpop.f32.mrb[0].mxu0
  %645 = vmatprep.mubr.f32.mxu0 0.0
  %646 = vmatmul.mubr.f32.gmra.mrb[0].mxu0 %v458
  %v647 = vpop.f32.mrb[0].mxu0
  %v648 = vadd.f32 0.0, %v647
  %v649 = vpop.f32.mrb[0].mxu0
  %650 = vmatprep.mubr.f32.mxu0 0.0
  %651 = vmatmul.mubr.f32.gmra.mrb[0].mxu0 %v461
  %v652 = vpop.f32.mrb[0].mxu0
  %v653 = vadd.f32 0.0, %v652
  %v654 = vpop.f32.mrb[0].mxu0
  %655 = vmatprep.mubr.f32.mxu0 0.0
  %656 = vmatmul.mubr.f32.gmra.mrb[0].mxu0 %v464
  %v657 = vpop.f32.mrb[0].mxu0
  %v658 = vadd.f32 0.0, %v657
  %v659 = vpop.f32.mrb[0].mxu0
  %660 = vmatprep.mubr.f32.mxu0 0.0
  %661 = vmatmul.mubr.f32.gmra.mrb[0].mxu0 %v467
  %v662 = vpop.f32.mrb[0].mxu0
  %v663 = vadd.f32 0.0, %v662
  %v664 = vpop.f32.mrb[0].mxu0
  %665 = vmatprep.mubr.f32.mxu0 0.0
  %666 = vmatmul.mubr.f32.gmra.mrb[0].mxu0 %v470
  %v667 = vpop.f32.mrb[0].mxu0
  %v668 = vadd.f32 0.0, %v667
  %v669 = vpop.f32.mrb[0].mxu0
  %670 = vmatprep.mubr.f32.mxu0 0.0
  %671 = vmatmul.mubr.f32.gmra.mrb[0].mxu0 %v473
  %v672 = vpop.f32.mrb[0].mxu0
  %v673 = vadd.f32 0.0, %v672
  %v674 = vpop.f32.mrb[0].mxu0
  %675 = vmatprep.mubr.f32.mxu0 0.0
  %676 = vmatmul.mubr.f32.gmra.mrb[0].mxu0 %v476
  %v677 = vpop.f32.mrb[0].mxu0
  %v678 = vadd.f32 0.0, %v677
  %v679 = vpop.f32.mrb[0].mxu0
  %680 = vmatprep.mubr.f32.mxu0 0.0
  %681 = vmatmul.mubr.f32.gmra.mrb[0].mxu0 %v479
  %v682 = vpop.f32.mrb[0].mxu0
  %v683 = vadd.f32 0.0, %v682
  %v684 = vpop.f32.mrb[0].mxu0
  %685 = vmatprep.mubr.f32.mxu0 0.0
  %686 = vmatmul.mubr.f32.gmra.mrb[0].mxu0 %v482
  %v687 = vpop.f32.mrb[0].mxu0
  %v688 = vadd.f32 0.0, %v687
  %v689 = vpop.f32.mrb[0].mxu0
  %690 = vmatprep.mubr.f32.mxu0 0.0
  %691 = vmatmul.mubr.f32.gmra.mrb[0].mxu0 %v485
  %v692 = vpop.f32.mrb[0].mxu0
  %v693 = vadd.f32 0.0, %v692
  %v694 = vpop.f32.mrb[0].mxu0
  %695 = vmatprep.mubr.f32.mxu0 0.0
  %696 = vmatmul.mubr.f32.gmra.mrb[0].mxu0 %v488
  %v697 = vpop.f32.mrb[0].mxu0
  %v698 = vadd.f32 0.0, %v697
  %v699 = vpop.f32.mrb[0].mxu0
  %700 = vmatprep.mubr.f32.mxu0 0.0
  %701 = vmatmul.mubr.f32.gmra.mrb[0].mxu0 %v491
  %v702 = vpop.f32.mrb[0].mxu0
  %v703 = vadd.f32 0.0, %v702
  %v704 = vpop.f32.mrb[0].mxu0
  %705 = vmatprep.mubr.f32.mxu0 0.0
  %706 = vmatmul.mubr.f32.gmra.mrb[0].mxu0 %v494
  %v707 = vpop.f32.mrb[0].mxu0
  %v708 = vadd.f32 0.0, %v707
  %v709 = vpop.f32.mrb[0].mxu0
  %710 = vmatprep.mubr.f32.mxu0 0.0
  %711 = vmatmul.mubr.f32.gmra.mrb[0].mxu0 %v497
  %v712 = vpop.f32.mrb[0].mxu0
  %v713 = vadd.f32 0.0, %v712
  %v714 = vpop.f32.mrb[0].mxu0
  %715 = vmatprep.mubr.f32.mxu0 0.0
  %716 = vmatmul.mubr.f32.gmra.mrb[0].mxu0 %v500
  %v717 = vpop.f32.mrb[0].mxu0
  %v718 = vadd.f32 0.0, %v717
  %v719 = vpop.f32.mrb[0].mxu0
  %720 = vmatprep.mubr.f32.mxu0 0.0
  %721 = vmatmul.mubr.f32.gmra.mrb[0].mxu0 %v503
  %v722 = vpop.f32.mrb[0].mxu0
  %v723 = vadd.f32 0.0, %v722
  %v724 = vpop.f32.mrb[0].mxu0
  %725 = vmatprep.mubr.f32.mxu0 0.0
  %726 = vmatmul.mubr.f32.gmra.mrb[0].mxu0 %v506
  %v727 = vpop.f32.mrb[0].mxu0
  %v728 = vadd.f32 0.0, %v727
  %v729 = vpop.f32.mrb[0].mxu0
  %730 = vmatprep.mubr.f32.mxu0 0.0
  %731 = vmatmul.mubr.f32.gmra.mrb[0].mxu0 %v509
  %v732 = vpop.f32.mrb[0].mxu0
  %v733 = vadd.f32 0.0, %v732
  %v734 = vpop.f32.mrb[0].mxu0
  %735 = vdwg.mxu0
  %vm736 = vcmask 15360
  %737 = vst.msk [vmem:[%s4] sm:$0xff] %vm736, %v578
  %738 = vst.msk [vmem:[%s4 + $0x8] sm:$0xff] %vm736, %v583
  %739 = vst.msk [vmem:[%s4 + $0x10] sm:$0xff] %vm736, %v588
  %740 = vst.msk [vmem:[%s4 + $0x18] sm:$0xff] %vm736, %v593
  %741 = vst.msk [vmem:[%s4 + $0x20] sm:$0xff] %vm736, %v598
  %742 = vst.msk [vmem:[%s4 + $0x28] sm:$0xff] %vm736, %v603
  %743 = vst.msk [vmem:[%s4 + $0x30] sm:$0xff] %vm736, %v608
  %744 = vst.msk [vmem:[%s4 + $0x38] sm:$0xff] %vm736, %v613
  %745 = vst.msk [vmem:[%s4 + $0x40] sm:$0xff] %vm736, %v618
  %746 = vst.msk [vmem:[%s4 + $0x48] sm:$0xff] %vm736, %v623
  %747 = vst.msk [vmem:[%s4 + $0x50] sm:$0xff] %vm736, %v628
  %748 = vst.msk [vmem:[%s4 + $0x58] sm:$0xff] %vm736, %v633
  %749 = vst.msk [vmem:[%s4 + $0x60] sm:$0xff] %vm736, %v638
  %750 = vst.msk [vmem:[%s4 + $0x68] sm:$0xff] %vm736, %v643
  %751 = vst.msk [vmem:[%s4 + $0x70] sm:$0xff] %vm736, %v648
  %752 = vst.msk [vmem:[%s4 + $0x78] sm:$0xff] %vm736, %v653
  %753 = vst.msk [vmem:[%s4 + $0x80] sm:$0xff] %vm736, %v658
  %754 = vst.msk [vmem:[%s4 + $0x88] sm:$0xff] %vm736, %v663
  %755 = vst.msk [vmem:[%s4 + $0x90] sm:$0xff] %vm736, %v668
  %756 = vst.msk [vmem:[%s4 + $0x98] sm:$0xff] %vm736, %v673
  %757 = vst.msk [vmem:[%s4 + $0xa0] sm:$0xff] %vm736, %v678
  %758 = vst.msk [vmem:[%s4 + $0xa8] sm:$0xff] %vm736, %v683
  %759 = vst.msk [vmem:[%s4 + $0xb0] sm:$0xff] %vm736, %v688
  %760 = vst.msk [vmem:[%s4 + $0xb8] sm:$0xff] %vm736, %v693
  %761 = vst.msk [vmem:[%s4 + $0xc0] sm:$0xff] %vm736, %v698
  %762 = vst.msk [vmem:[%s4 + $0xc8] sm:$0xff] %vm736, %v703
  %763 = vst.msk [vmem:[%s4 + $0xd0] sm:$0xff] %vm736, %v708
  %764 = vst.msk [vmem:[%s4 + $0xd8] sm:$0xff] %vm736, %v713
  %765 = vst.msk [vmem:[%s4 + $0xe0] sm:$0xff] %vm736, %v718
  %766 = vst.msk [vmem:[%s4 + $0xe8] sm:$0xff] %vm736, %v723
  %767 = vst.msk [vmem:[%s4 + $0xf0] sm:$0xff] %vm736, %v728
  %768 = vst.msk [vmem:[%s4 + $0xf8] sm:$0xff] %vm736, %v733
  // Predicated region
  $region14: #{tpu_custom_call.1} parent=0 // pred_check
    _
  $region15: #{tpu_custom_call.1} parent=0 // pred_check_branch
    %770 = sbr.rel (0) target = $region17
  $region16: #{tpu_custom_call.1} parent=0 // pred_region
    _
  $region17: #{tpu_custom_call.1} parent=0 // pred_fallthru
    _
  // Predicated region
  $region18: #{tpu_custom_call.1} parent=0 // pred_check
    _
  $region19: #{tpu_custom_call.1} parent=0 // pred_check_branch
    %772 = sbr.rel (0) target = $region21
  $region20: #{tpu_custom_call.1} parent=0 // pred_region
    _
  $region21: #{tpu_custom_call.1} parent=0 // pred_fallthru
    _
  // Predicated region
  $region22: #{tpu_custom_call.1} parent=0 // pred_check
    _
  $region23: #{tpu_custom_call.1} parent=0 // pred_check_branch
    %774 = sbr.rel (0) target = $region25
  $region24: #{tpu_custom_call.1} parent=0 // pred_region
    _
  $region25: #{tpu_custom_call.1} parent=0 // pred_fallthru
    _
  // Predicated region
  $region26: #{tpu_custom_call.1} parent=0 // pred_check
    _
  $region27: #{tpu_custom_call.1} parent=0 // pred_check_branch
    %776 = sbr.rel (0) target = $region29
  $region28: #{tpu_custom_call.1} parent=0 // pred_region
    _
  $region29: #{tpu_custom_call.1} parent=0 // pred_fallthru
    _

</llo_original>
